<compile_context>
chip_gen: v6e
topology: v6e:2x2x1
jax: 0.10.0
libtpu: 0.0.40
codegen_flags: <defaults>
</compile_context>

<pallas_src>
import functools
import math

import jax
import jax.numpy as jnp
from jax import lax
from jax.experimental import pallas as pl
from jax.experimental.pallas import tpu as pltpu

_VMEM_LIMIT = 48 * 1024 * 1024  # > 32 MiB scoped default, safe on v5e/v6e/v7x


def _pick_tile(dim, preferred):
    """Largest tile <= preferred that divides dim (keeps grids exact)."""
    t = min(dim, preferred)
    while dim % t:
        t -= 1
    return t


def _itemsize(x):
    return jnp.dtype(x.dtype).itemsize


# --------------------------- QKV projection kernel --------------------------

def _proj_heads_kernel(x_ref, w_ref, o_ref, acc_ref):
    # x_ref: (1, tl, tk); w_ref: (1, tk, D); o_ref: (1, 1, tl, D); acc: (tl, D) f32
    k = pl.program_id(3)

    @pl.when(k == 0)
    def _init():
        acc_ref[...] = jnp.zeros_like(acc_ref)

    acc_ref[...] += jnp.dot(x_ref[0], w_ref[0], preferred_element_type=jnp.float32)

    @pl.when(k == pl.num_programs(3) - 1)
    def _finalize():
        o_ref[0, 0] = acc_ref[...].astype(o_ref.dtype)


def project_to_heads(x, w_heads, *, tl, tk):
    """x: (B, L, K); w_heads: (H, K, D). Returns (B, H, L, D) = per-head x @ w."""
    B, L, Kdim = x.shape
    H, _, D = w_heads.shape
    grid = (B, H, L // tl, Kdim // tk)
    flops = 2 * B * L * Kdim * H * D
    bytes_accessed = (x.size + w_heads.size + B * H * L * D) * _itemsize(x)
    return pl.pallas_call(
        _proj_heads_kernel,
        out_shape=jax.ShapeDtypeStruct((B, H, L, D), x.dtype),
        grid=grid,
        in_specs=[
            pl.BlockSpec((1, tl, tk), lambda b, h, l, k: (b, l, k)),
            pl.BlockSpec((1, tk, D), lambda b, h, l, k: (h, k, 0)),
        ],
        out_specs=pl.BlockSpec((1, 1, tl, D), lambda b, h, l, k: (b, h, l, 0)),
        scratch_shapes=[pltpu.VMEM((tl, D), jnp.float32)],
        compiler_params=pltpu.CompilerParams(
            dimension_semantics=("parallel", "parallel", "parallel", "arbitrary"),
            vmem_limit_bytes=_VMEM_LIMIT,
        ),
        cost_estimate=pl.CostEstimate(
            flops=int(flops), transcendentals=0, bytes_accessed=int(bytes_accessed)
        ),
    )(x, w_heads)


# --------------------------- flash attention kernel --------------------------

def _flash_attention_kernel(q_ref, k_ref, v_ref, o_ref, m_sc, l_sc, acc_sc, *, scale):
    ki = pl.program_id(4)
    nk = pl.num_programs(4)

    @pl.when(ki == 0)
    def _init():
        m_sc[...] = jnp.full_like(m_sc, -jnp.inf)
        l_sc[...] = jnp.zeros_like(l_sc)
        acc_sc[...] = jnp.zeros_like(acc_sc)

    q = q_ref[0, 0]  # (tq, D)
    k = k_ref[0, 0]  # (tk, D)
    v = v_ref[0, 0]  # (tk, D)
    tq, tk = q.shape[0], k.shape[0]

    # Q @ K^T on the MXU without materializing a K transpose; f32 scores end-to-end.
    s = lax.dot_general(
        q, k, (((1,), (1,)), ((), ())), preferred_element_type=jnp.float32
    ) * scale

    # In-kernel causal mask (module has is_causal=True) -> no O(L^2) mask DMA.
    row = pl.program_id(3) * tq + lax.broadcasted_iota(jnp.int32, (tq, tk), 0)
    col = ki * tk + lax.broadcasted_iota(jnp.int32, (tq, tk), 1)
    s = jnp.where(row >= col, s, jnp.finfo(jnp.float32).min)

    # Online softmax (f32 running max / sum / accumulator in VMEM scratch).
    m_prev = m_sc[...]
    m_new = jnp.maximum(m_prev, jnp.max(s, axis=-1, keepdims=True))
    alpha = jnp.exp(m_prev - m_new)
    p = jnp.exp(s - m_new)
    l_sc[...] = alpha * l_sc[...] + jnp.sum(p, axis=-1, keepdims=True)
    acc_sc[...] = alpha * acc_sc[...] + jnp.dot(
        p.astype(v.dtype), v, preferred_element_type=jnp.float32
    )
    m_sc[...] = m_new

    @pl.when(ki == nk - 1)
    def _finalize():
        inv_l = pl.reciprocal(l_sc[...], approx=False)  # reciprocal + multiply epilogue
        o_ref[0, 0] = (acc_sc[...] * inv_l).astype(o_ref.dtype)


def flash_attention(Q, K, V, *, scale, tq, tk):
    """Q: (B, H, L, D); K, V: (B, Hkv, L, D) -> (B, H, L, D). GQA via index_map."""
    B, H, L, D = Q.shape
    Hkv = K.shape[1]
    G = H // Hkv  # num_key_value_groups (repeat_kv realized in the index_map)
    grid = (B, Hkv, G, L // tq, L // tk)
    kernel = functools.partial(_flash_attention_kernel, scale=scale)
    flops = 4 * B * H * L * L * D
    transcendentals = B * H * L * L
    bytes_accessed = (Q.size + K.size + V.size + Q.size) * _itemsize(Q)
    return pl.pallas_call(
        kernel,
        out_shape=jax.ShapeDtypeStruct((B, H, L, D), Q.dtype),
        grid=grid,
        in_specs=[
            pl.BlockSpec((1, 1, tq, D), lambda b, hk, g, qi, ki: (b, hk * G + g, qi, 0)),
            pl.BlockSpec((1, 1, tk, D), lambda b, hk, g, qi, ki: (b, hk, ki, 0)),
            pl.BlockSpec((1, 1, tk, D), lambda b, hk, g, qi, ki: (b, hk, ki, 0)),
        ],
        out_specs=pl.BlockSpec(
            (1, 1, tq, D), lambda b, hk, g, qi, ki: (b, hk * G + g, qi, 0)
        ),
        scratch_shapes=[
            pltpu.VMEM((tq, 1), jnp.float32),   # running max
            pltpu.VMEM((tq, 1), jnp.float32),   # running sum
            pltpu.VMEM((tq, D), jnp.float32),   # output accumulator
        ],
        compiler_params=pltpu.CompilerParams(
            dimension_semantics=("parallel", "parallel", "parallel", "parallel", "arbitrary"),
            vmem_limit_bytes=_VMEM_LIMIT,
        ),
        cost_estimate=pl.CostEstimate(
            flops=int(flops),
            transcendentals=int(transcendentals),
            bytes_accessed=int(bytes_accessed),
        ),
    )(Q, K, V)


# ----------------------------- O projection kernel ---------------------------

def _oproj_kernel(a_ref, w_ref, o_ref, acc_ref):
    # a_ref: (1, 1, tl, D); w_ref: (1, D, tn); o_ref: (1, tl, tn); acc: (tl, tn) f32
    h = pl.program_id(3)

    @pl.when(h == 0)
    def _init():
        acc_ref[...] = jnp.zeros_like(acc_ref)

    acc_ref[...] += jnp.dot(a_ref[0, 0], w_ref[0], preferred_element_type=jnp.float32)

    @pl.when(h == pl.num_programs(3) - 1)
    def _finalize():
        o_ref[0] = acc_ref[...].astype(o_ref.dtype)


def o_projection(attn, wo_heads, *, tl, tn):
    """attn: (B, H, L, D); wo_heads: (H, D, N). Returns (B, L, N) = concat-heads @ Wo^T."""
    B, H, L, D = attn.shape
    N = wo_heads.shape[2]
    grid = (B, L // tl, N // tn, H)  # head axis is the reduction (last, "arbitrary")
    flops = 2 * B * L * H * D * N
    bytes_accessed = (attn.size + wo_heads.size + B * L * N) * _itemsize(attn)
    return pl.pallas_call(
        _oproj_kernel,
        out_shape=jax.ShapeDtypeStruct((B, L, N), attn.dtype),
        grid=grid,
        in_specs=[
            pl.BlockSpec((1, 1, tl, D), lambda b, l, n, h: (b, h, l, 0)),
            pl.BlockSpec((1, D, tn), lambda b, l, n, h: (h, 0, n)),
        ],
        out_specs=pl.BlockSpec((1, tl, tn), lambda b, l, n, h: (b, l, n)),
        scratch_shapes=[pltpu.VMEM((tl, tn), jnp.float32)],
        compiler_params=pltpu.CompilerParams(
            dimension_semantics=("parallel", "parallel", "parallel", "arbitrary"),
            vmem_limit_bytes=_VMEM_LIMIT,
        ),
        cost_estimate=pl.CostEstimate(
            flops=int(flops), transcendentals=0, bytes_accessed=int(bytes_accessed)
        ),
    )(attn, wo_heads)


# ------------------------------- JAX glue ops --------------------------------

def rotate_half(x):
    x1, x2 = jnp.split(x, 2, axis=-1)
    return jnp.concatenate([-x2, x1], axis=-1)


def rotary_cos_sin(position_ids, head_dim, rope_theta, dtype):
    inv_freq = 1.0 / (
        rope_theta ** (jnp.arange(0, head_dim, 2, dtype=jnp.float32) / head_dim)
    )
    freqs = position_ids.astype(jnp.float32)[..., None] * inv_freq[None, None, :]
    emb = jnp.concatenate([freqs, freqs], axis=-1)  # (B, L, D)
    return jnp.cos(emb).astype(dtype), jnp.sin(emb).astype(dtype)


def apply_rotary_pos_emb(q, k, cos, sin):
    cos = cos[:, None, :, :]  # (B, 1, L, D)
    sin = sin[:, None, :, :]
    q_embed = q * cos + rotate_half(q) * sin
    k_embed = k * cos + rotate_half(k) * sin
    return q_embed, k_embed


class NeuronAttentionPallas:
    """Prefill forward of NeuronAttentionBase (FlashAttentionStrategy.NONE path, tp_degree=1)."""

    def __init__(self, hidden_size, num_attention_heads, num_key_value_heads,
                 head_dim=None, rope_theta=10000.0, dtype=jnp.float32,
                 key=jax.random.PRNGKey(0)):
        self.hidden_size = hidden_size
        self.num_heads = num_attention_heads
        self.num_kv_heads = num_key_value_heads
        self.head_dim = head_dim or hidden_size // num_attention_heads
        self.rope_theta = rope_theta
        self.dtype = dtype
        self.qk_scale = 1.0 / math.sqrt(self.head_dim)  # _qk_scale is None

        k1, k2, k3, k4 = jax.random.split(key, 4)
        s = 1.0 / math.sqrt(hidden_size)
        H, Hkv, D = self.num_heads, self.num_kv_heads, self.head_dim
        # PyTorch nn.Linear weight layout: (out_features, in_features); no bias.
        self.wq = (jax.random.normal(k1, (H * D, hidden_size)) * s).astype(dtype)
        self.wk = (jax.random.normal(k2, (Hkv * D, hidden_size)) * s).astype(dtype)
        self.wv = (jax.random.normal(k3, (Hkv * D, hidden_size)) * s).astype(dtype)
        self.wo = (jax.random.normal(k4, (hidden_size, H * D)) * s).astype(dtype)

        # Kernel-friendly layouts computed ONCE (no per-call weight transpose in HBM):
        #   wq_heads[h, k, d] == wq[h*D + d, k]   (so x @ wq_heads[h] == (x @ wq.T)[:, h*D:(h+1)*D])
        #   wo_heads[h, d, n] == wo[n, h*D + d]   (so sum_h attn_h @ wo_heads[h] == attn_flat @ wo.T)
        self.wq_heads = self.wq.reshape(H, D, hidden_size).transpose(0, 2, 1)
        self.wk_heads = self.wk.reshape(Hkv, D, hidden_size).transpose(0, 2, 1)
        self.wv_heads = self.wv.reshape(Hkv, D, hidden_size).transpose(0, 2, 1)
        self.wo_heads = self.wo.reshape(hidden_size, H, D).transpose(1, 2, 0)
        # TODO(synk): qk_layernorm / fused-rmsnorm QKV / clip_qkv / qkv|o bias are disabled in this config.

    def __call__(self, hidden_states, attention_mask=None, position_ids=None):
        # TODO(synk): attention_mask (padding) is not folded into the kernel; the causal
        # mask (is_causal=True) is generated in-kernel. Decode / flash-decoding paths
        # (past_key_value, collectives) are not implemented.
        B, L, _ = hidden_states.shape
        tl = _pick_tile(L, 256)
        tkk = _pick_tile(self.hidden_size, 512)
        tq = _pick_tile(L, 256)
        tkv = _pick_tile(L, 256)
        tn = _pick_tile(self.hidden_size, 512)

        # qkv_proj (column-parallel, tp_degree=1) fused with move_heads_front.
        Q = project_to_heads(hidden_states, self.wq_heads, tl=tl, tk=tkk)  # (B, H, L, D)
        K = project_to_heads(hidden_states, self.wk_heads, tl=tl, tk=tkk)  # (B, Hkv, L, D)
        V = project_to_heads(hidden_states, self.wv_heads, tl=tl, tk=tkk)  # (B, Hkv, L, D)

        cos, sin = rotary_cos_sin(position_ids, self.head_dim, self.rope_theta,
                                  hidden_states.dtype)
        Q, K = apply_rotary_pos_emb(Q, K, cos, sin)

        # perform_prefill (native path) as a flash-style kernel with online softmax.
        attn = flash_attention(Q, K, V, scale=self.qk_scale, tq=tq, tk=tkv)  # (B, H, L, D)

        # o_proj consumes (B, H, L, D) directly and reduces over heads -> (B, L, hidden).
        out = o_projection(attn, self.wo_heads, tl=tl, tn=tn)

        return out, (K, V), cos, sin


# --------------------------------- reference ---------------------------------

def reference_forward(mod, hidden_states, position_ids):
    B, L, H = hidden_states.shape
    x2d = hidden_states.reshape(B * L, H)
    Q = (x2d @ mod.wq.T).reshape(B, L, mod.num_heads, mod.head_dim).transpose(0, 2, 1, 3)
    K = (x2d @ mod.wk.T).reshape(B, L, mod.num_kv_heads, mod.head_dim).transpose(0, 2, 1, 3)
    V = (x2d @ mod.wv.T).reshape(B, L, mod.num_kv_heads, mod.head_dim).transpose(0, 2, 1, 3)
    cos, sin = rotary_cos_sin(position_ids, mod.head_dim, mod.rope_theta, hidden_states.dtype)
    Q, K = apply_rotary_pos_emb(Q, K, cos, sin)
    groups = mod.num_heads // mod.num_kv_heads
    Kr = jnp.repeat(K, groups, axis=1)
    Vr = jnp.repeat(V, groups, axis=1)
    causal = jnp.tril(jnp.ones((L, L), dtype=bool))
    s = jnp.einsum("bhqd,bhkd->bhqk", Q, Kr) * mod.qk_scale
    s = jnp.where(causal[None, None, :, :], s, jnp.finfo(s.dtype).min)
    p = jax.nn.softmax(s.astype(jnp.float32), axis=-1).astype(Q.dtype)
    attn = jnp.einsum("bhqk,bhkd->bhqd", p, Vr)
    attn = attn.transpose(0, 2, 1, 3).reshape(B * L, mod.num_heads * mod.head_dim)
    return (attn @ mod.wo.T).reshape(B, L, mod.hidden_size)


if __name__ == "__main__":
    B, L = 2, 8
    hidden_size = 32
    num_heads = 4
    num_kv_heads = 2
    head_dim = hidden_size // num_heads  # 8

    key = jax.random.PRNGKey(0)
    k_x, k_w = jax.random.split(key)
    hidden_states = jax.random.normal(k_x, (B, L, hidden_size), dtype=jnp.float32)
    position_ids = jnp.broadcast_to(jnp.arange(L, dtype=jnp.int32)[None, :], (B, L))

    mod = NeuronAttentionPallas(hidden_size, num_heads, num_kv_heads,
                                head_dim=head_dim, key=k_w)

    out, (K_cache, V_cache), cos, sin = mod(hidden_states, position_ids=position_ids)
    out = jax.block_until_ready(out)

    ref = reference_forward(mod, hidden_states, position_ids)
    assert out.shape == (B, L, hidden_size)
    assert K_cache.shape == (B, num_kv_heads, L, head_dim)
    assert V_cache.shape == (B, num_kv_heads, L, head_dim)
    assert jnp.allclose(out, ref, rtol=1e-4, atol=1e-4), "mismatch vs reference"

    print("KERNEL_OK")
</pallas_src>

<mosaic_0001>
module attributes {stable_mosaic.version = 11 : i64} {
  func.func @_proj_heads_kernel(%arg0: i32, %arg1: i32, %arg2: i32, %arg3: i32, %arg4: memref<1x8x32xf32, #tpu.memory_space<vmem>>, %arg5: memref<1x32x8xf32, #tpu.memory_space<vmem>>, %arg6: memref<1x1x8x8xf32, #tpu.memory_space<vmem>>, %arg7: memref<8x8xf32, #tpu.memory_space<vmem>>) attributes {dimension_semantics = [#tpu.dimension_semantics<parallel>, #tpu.dimension_semantics<parallel>, #tpu.dimension_semantics<parallel>, #tpu.dimension_semantics<arbitrary>], iteration_bounds = array<i64: 2, 4, 1, 1>, scalar_prefetch = 0 : i64, scratch_operands = 1 : i64, tpu.core_type = #tpu.core_type<tc>, window_params = [{transform_indices = @transform_0, window_bounds = array<i64: 1, 8, 32>}, {transform_indices = @transform_1, window_bounds = array<i64: 1, 32, 8>}, {transform_indices = @transform_2, window_bounds = array<i64: 1, 1, 8, 8>}]} {
    %c0_i32 = arith.constant 0 : i32
    %0 = arith.cmpi eq, %arg3, %c0_i32 : i32
    %1 = arith.extui %0 : i1 to i32
    %c0_i32_0 = arith.constant 0 : i32
    %2 = arith.cmpi ne, %1, %c0_i32_0 : i32
    scf.if %2 {
      %cst_12 = arith.constant 0.000000e+00 : f32
      %14 = vector.broadcast %cst_12 : f32 to vector<8x8xf32>
      %c0_13 = arith.constant 0 : index
      %c0_14 = arith.constant 0 : index
      %15 = vector.load %arg7[%c0_13, %c0_14] : memref<8x8xf32, #tpu.memory_space<vmem>>, vector<8x8xf32>
      tpu.vector_store %arg7[%c0_13, %c0_14], %14 {strides = array<i32>} : memref<8x8xf32, #tpu.memory_space<vmem>>, vector<8x8xf32>,
    } else {
    }
    %c0 = arith.constant 0 : index
    %c0_1 = arith.constant 0 : index
    %3 = vector.load %arg7[%c0, %c0_1] : memref<8x8xf32, #tpu.memory_space<vmem>>, vector<8x8xf32>
    %c0_2 = arith.constant 0 : index
    %c0_3 = arith.constant 0 : index
    %c0_4 = arith.constant 0 : index
    %4 = vector.load %arg4[%c0_2, %c0_3, %c0_4] : memref<1x8x32xf32, #tpu.memory_space<vmem>>, vector<1x8x32xf32>
    %5 = vector.shape_cast %4 : vector<1x8x32xf32> to vector<8x32xf32>
    %c0_5 = arith.constant 0 : index
    %c0_6 = arith.constant 0 : index
    %c0_7 = arith.constant 0 : index
    %6 = vector.load %arg5[%c0_5, %c0_6, %c0_7] : memref<1x32x8xf32, #tpu.memory_space<vmem>>, vector<1x32x8xf32>
    %7 = vector.shape_cast %6 : vector<1x32x8xf32> to vector<32x8xf32>
    %cst = arith.constant dense<0.000000e+00> : vector<8x8xf32>
    %8 = tpu.matmul %5, %7, %cst {dimension_numbers = #tpu.dot_dimension_numbers<[1], [0], [0], [1], [0, 0, 1, 1], [], []>} : vector<8x32xf32>, vector<32x8xf32>, vector<8x8xf32> -> vector<8x8xf32>
    %9 = arith.addf %3, %8 : vector<8x8xf32>
    %c0_8 = arith.constant 0 : index
    %c0_9 = arith.constant 0 : index
    %10 = vector.load %arg7[%c0_8, %c0_9] : memref<8x8xf32, #tpu.memory_space<vmem>>, vector<8x8xf32>
    tpu.vector_store %arg7[%c0_8, %c0_9], %9 {strides = array<i32>} : memref<8x8xf32, #tpu.memory_space<vmem>>, vector<8x8xf32>,
    %c0_i32_10 = arith.constant 0 : i32
    %11 = arith.cmpi eq, %arg3, %c0_i32_10 : i32
    %12 = arith.extui %11 : i1 to i32
    %c0_i32_11 = arith.constant 0 : i32
    %13 = arith.cmpi ne, %12, %c0_i32_11 : i32
    scf.if %13 {
      %c0_12 = arith.constant 0 : index
      %c0_13 = arith.constant 0 : index
      %14 = vector.load %arg7[%c0_12, %c0_13] : memref<8x8xf32, #tpu.memory_space<vmem>>, vector<8x8xf32>
      %c0_14 = arith.constant 0 : index
      %c0_15 = arith.constant 0 : index
      %c0_16 = arith.constant 0 : index
      %c0_17 = arith.constant 0 : index
      %15 = vector.load %arg6[%c0_14, %c0_15, %c0_16, %c0_17] : memref<1x1x8x8xf32, #tpu.memory_space<vmem>>, vector<1x1x8x8xf32>
      %16 = vector.shape_cast %15 : vector<1x1x8x8xf32> to vector<8x8xf32>
      %17 = vector.shape_cast %14 : vector<8x8xf32> to vector<1x1x8x8xf32>
      tpu.vector_store %arg6[%c0_14, %c0_15, %c0_16, %c0_17], %17 {strides = array<i32>} : memref<1x1x8x8xf32, #tpu.memory_space<vmem>>, vector<1x1x8x8xf32>,
    } else {
    }
    return
  }
  func.func @transform_0(%arg0: i32, %arg1: i32, %arg2: i32, %arg3: i32) -> (i32, i32, i32) {
    %c0_i32 = arith.constant 0 : i32
    return %arg0, %arg2, %arg3 : i32, i32, i32
  }
  func.func @transform_1(%arg0: i32, %arg1: i32, %arg2: i32, %arg3: i32) -> (i32, i32, i32) {
    %c0_i32 = arith.constant 0 : i32
    %c0_i32_0 = arith.constant 0 : i32
    return %arg1, %arg3, %c0_i32 : i32, i32, i32
  }
  func.func @transform_2(%arg0: i32, %arg1: i32, %arg2: i32, %arg3: i32) -> (i32, i32, i32, i32) {
    %c0_i32 = arith.constant 0 : i32
    %c0_i32_0 = arith.constant 0 : i32
    return %arg0, %arg1, %arg2, %c0_i32 : i32, i32, i32, i32
  }
}

</mosaic_0001>

<llo_original>
// kernel: tpu_custom_call.1
$region0: #{tpu_custom_call.1}
  #allocation0 [shape = 'u32[]', space=smem, size = 0x4, offset = 0x4, fixed_abs, tag = 'smem constant byte address 0x4 - core index']
  #allocation1 [shape = 'u32[144,128]{1,0:T(1,128)}', space=vmem, size = 0x12000, scoped, tag = 'internal scratch']
  #allocation2 [shape = 'f32[8,8]{1,0:T(8,128)}', space=vmem, size = 0x1000, scoped, tag = 'scratch operand']
  %s0 = inlined_call_operand.vmem [shape: f32[2,8,32], index: 0, kind: input, shape index: {}]
  %s1 = inlined_call_operand.vmem [shape: f32[4,32,8], index: 1, kind: input, shape index: {}]
  %s2 = inlined_call_operand.hbm [shape: f32[2,4,8,8], index: 2, kind: output, shape index: {}]
  %s3 = sld [smem:[#allocation0]]
  $region49: #{tpu_custom_call.1} parent=0
    _
  %s5 = ssub.s32 1, %s3
  %s6 = scalar_select 0, %s5, %s3
  $region1: #{tpu_custom_call.1} parent=0
    #allocation3 [shape = 'u8[8192]{0}', space=vmem, size = 0x2000, scoped, tag = 'output window, operand 0']
    #allocation4 [shape = 's32[2]{0}', space=sflag, size = 0x8, scoped, tag = 'scoped memory for tpu_custom_call.1']
    %7 = vsyncpa [#allocation4], 0
    %s8 = scalar_lea.sflag [#allocation4], 1
    %9 = vsyncpa %s8, 0
    loop: start=0, step=1, limit=10
    $region2: #{tpu_custom_call.1} parent=1 // loop_pre_header
      _
    $region3: #{tpu_custom_call.1} parent=1 // loop_header
      %s11 = sphi 0, %s15
      %p12 = scmp.ge.s32.totalorder %s11, 10
      %s18 = sphi 0, %s44
      %s19 = sphi 0, %s40
      %s20 = sphi 0, %s36
      %s21 = sphi 0, %s32
      %s22 = sphi 0, %s18
      %s23 = sphi 0, %s19
      %s24 = sphi 0, %s20
      %s25 = sphi 0, %s21
      %s26 = sphi 0, %s22
      %s27 = sphi 0, %s23
      %s28 = sphi 0, %s24
      %s29 = sphi 0, %s25
      %s51 = sphi 0, %s53
      %s54 = sphi 0, %s51
      %s55 = sphi 0, %s54
      %s71 = sphi 0, %s55
      %s79 = sphi 0, %s81
      %s82 = sphi 0, %s79
      %s83 = sphi 0, %s82
      %s99 = sphi 0, %s83
      %s109 = sphi 0, %s111
      %s112 = sphi 0, %s109
      %s113 = sphi 0, %s112
      %s129 = sphi 0, %s113
    $region4: #{tpu_custom_call.1} parent=1 // loop_header_branch
      %14 = sbr.rel (%p12) target = $region8
    $region5: #{tpu_custom_call.1} parent=1 // loop_body
      %s16 = ssub.s32 %s11, 1
      %s17 = ssub.s32 %s11, 2
      %s30 = sadd.s32 1, %s21
      %p31 = scmp.ge.s32.totalorder %s30, 1
      %s32 = scalar_select %p31, 0, %s30
      %s33 = sadd.s32 1, %s20
      %s34 = scalar_select %p31, %s33, %s20
      %p35 = scmp.ge.s32.totalorder %s34, 1
      %s36 = scalar_select %p35, 0, %s34
      %s37 = sadd.s32 1, %s19
      %s38 = scalar_select %p35, %s37, %s19
      %p39 = scmp.ge.s32.totalorder %s38, 4
      %s40 = scalar_select %p39, 0, %s38
      %s41 = sadd.s32 1, %s18
      %s42 = scalar_select %p39, %s41, %s18
      %p43 = scmp.ge.s32.totalorder %s42, 2
      %s44 = scalar_select %p43, 0, %s42
      %s45 = ssub.s32 %s18, %s44
      %s46 = ssub.s32 %s20, %s36
      %s47 = sor.u32 %s45, %s46
      %s48 = ssub.s32 %s21, %s32
      %s49 = sor.u32 %s47, %s48
      %p50 = scmp.eq.s32.totalorder %s49, 0
      %s52 = sadd.s32 %s51, 1
      %s53 = scalar_select %p50, %s51, %s52
      %p56 = pneg %p50
      %p57 = scmp.eq.s32.totalorder %s11, 7
      %p58 = por %p56, %p57
      %p59 = scmp.ne.s32.totalorder %s51, %s54
      %p60 = scmp.eq.s32.totalorder %s11, 0
      %p61 = por %p59, %p60
      %p62 = scmp.ne.s32.totalorder %s51, %s54
      %p63 = scmp.eq.s32.totalorder %s16, 7
      %p64 = por %p62, %p63
      %p65 = scmp.ne.s32.totalorder %s54, %s55
      %p66 = scmp.eq.s32.totalorder %s16, 0
      %p67 = por %p65, %p66
      %p68 = scmp.ne.s32.totalorder %s54, %s55
      %p69 = scmp.eq.s32.totalorder %s17, 7
      %p70 = por %p68, %p69
      %p72 = scmp.ne.s32.totalorder %s55, %s71
      %p73 = scmp.eq.s32.totalorder %s17, 0
      %p74 = por %p72, %p73
      %s75 = ssub.s32 %s19, %s40
      %s76 = ssub.s32 %s21, %s32
      %s77 = sor.u32 %s75, %s76
      %p78 = scmp.eq.s32.totalorder %s77, 0
      %s80 = sadd.s32 %s79, 1
      %s81 = scalar_select %p78, %s79, %s80
      %p84 = pneg %p78
      %p85 = scmp.eq.s32.totalorder %s11, 7
      %p86 = por %p84, %p85
      %p87 = scmp.ne.s32.totalorder %s79, %s82
      %p88 = scmp.eq.s32.totalorder %s11, 0
      %p89 = por %p87, %p88
      %p90 = scmp.ne.s32.totalorder %s79, %s82
      %p91 = scmp.eq.s32.totalorder %s16, 7
      %p92 = por %p90, %p91
      %p93 = scmp.ne.s32.totalorder %s82, %s83
      %p94 = scmp.eq.s32.totalorder %s16, 0
      %p95 = por %p93, %p94
      %p96 = scmp.ne.s32.totalorder %s82, %s83
      %p97 = scmp.eq.s32.totalorder %s17, 7
      %p98 = por %p96, %p97
      %p100 = scmp.ne.s32.totalorder %s83, %s99
      %p101 = scmp.eq.s32.totalorder %s17, 0
      %p102 = por %p100, %p101
      %s103 = ssub.s32 %s18, %s44
      %s104 = ssub.s32 %s19, %s40
      %s105 = sor.u32 %s103, %s104
      %s106 = ssub.s32 %s20, %s36
      %s107 = sor.u32 %s105, %s106
      %p108 = scmp.eq.s32.totalorder %s107, 0
      %s110 = sadd.s32 %s109, 1
      %s111 = scalar_select %p108, %s109, %s110
      %p114 = pneg %p108
      %p115 = scmp.eq.s32.totalorder %s11, 7
      %p116 = por %p114, %p115
      %p117 = scmp.ne.s32.totalorder %s109, %s112
      %p118 = scmp.eq.s32.totalorder %s11, 0
      %p119 = por %p117, %p118
      %p120 = scmp.ne.s32.totalorder %s109, %s112
      %p121 = scmp.eq.s32.totalorder %s16, 7
      %p122 = por %p120, %p121
      %p123 = scmp.ne.s32.totalorder %s112, %s113
      %p124 = scmp.eq.s32.totalorder %s16, 0
      %p125 = por %p123, %p124
      %p126 = scmp.ne.s32.totalorder %s112, %s113
      %p127 = scmp.eq.s32.totalorder %s17, 7
      %p128 = por %p126, %p127
      %p130 = scmp.ne.s32.totalorder %s113, %s129
      %p131 = scmp.eq.s32.totalorder %s17, 0
      %p132 = por %p130, %p131
      %p133 = scmp.le.s32.totalorder 1, %s11
      %p134 = scmp.lt.s32.totalorder %s11, 9
      %p135 = pnand %p133, %p134
      %p136 = pneg %p135
      // Predicated region
      $region9: #{tpu_custom_call.1} parent=5 // pred_check
        _
      $region10: #{tpu_custom_call.1} parent=5 // pred_check_branch
        %138 = sbr.rel (%p135) target = $region12
      $region11: #{tpu_custom_call.1} parent=5 // pred_region
        %s139 = ssub.s32 %s11, 1
      $region12: #{tpu_custom_call.1} parent=5 // pred_fallthru
        _
      %p140 = scmp.lt.s32.totalorder %s11, 8
      // Predicated region
      $region13: #{tpu_custom_call.1} parent=5 // pred_check
        %p141 = pneg %p140
      $region14: #{tpu_custom_call.1} parent=5 // pred_check_branch
        %143 = sbr.rel (%p141) target = $region16
      $region15: #{tpu_custom_call.1} parent=5 // pred_region
        // Predicated region
        $region17: #{tpu_custom_call.1} parent=15 // pred_check
          %p144 = pneg %p61
        $region18: #{tpu_custom_call.1} parent=15 // pred_check_branch
          %146 = sbr.rel (%p144) target = $region20
        $region19: #{tpu_custom_call.1} parent=15 // pred_region
          %p147 = scmp.lt.s32.totalorder %s18, 1
          %s148 = scalar_select %p147, %s18, 1
          %p149 = scmp.lt.s32.totalorder %s20, 0
          %s150 = scalar_select %p149, %s20, 0
          %p151 = scmp.lt.s32.totalorder %s21, 0
          %s152 = scalar_select %p151, %s21, 0
          %s153 = sadd.s32 %s152, %s150
          %s154 = sadd.s32 %s153, %s148
          %s155 = smul.addr %s154, 8
          %s156 = scalar_lea.vmem %s0, %s155
        $region20: #{tpu_custom_call.1} parent=15 // pred_fallthru
          _
        // Predicated region
        $region21: #{tpu_custom_call.1} parent=15 // pred_check
          %p157 = pneg %p89
        $region22: #{tpu_custom_call.1} parent=15 // pred_check_branch
          %159 = sbr.rel (%p157) target = $region24
        $region23: #{tpu_custom_call.1} parent=15 // pred_region
          %s160 = smul.u32 4, %s21
          %p161 = scmp.lt.s32.totalorder %s19, 3
          %s162 = scalar_select %p161, %s19, 3
          %p163 = scmp.lt.s32.totalorder %s160, 3
          %s164 = scalar_select %p163, %s160, 3
          %s165 = smul.addr %s162, 4
          %s166 = sadd.s32 %s164, %s165
          %s167 = smul.addr %s166, 8
          %s168 = scalar_lea.vmem %s1, %s167
          %s169 = smul.u32 4, %s21
        $region24: #{tpu_custom_call.1} parent=15 // pred_fallthru
          _
      $region16: #{tpu_custom_call.1} parent=5 // pred_fallthru
        _
      %p170 = scmp.le.s32.totalorder 1, %s11
      %p171 = scmp.lt.s32.totalorder %s11, 9
      %p172 = pnand %p170, %p171
      %p173 = pneg %p172
      // Predicated region
      $region25: #{tpu_custom_call.1} parent=5 // pred_check
        _
      $region26: #{tpu_custom_call.1} parent=5 // pred_check_branch
        %175 = sbr.rel (%p172) target = $region28
      $region27: #{tpu_custom_call.1} parent=5 // pred_region
        %s176 = ssub.s32 %s11, 1
        %p177 = scmp.lt.s32.totalorder %s22, 1
        %s178 = scalar_select %p177, %s22, 1
        %p179 = scmp.lt.s32.totalorder %s24, 0
        %s180 = scalar_select %p179, %s24, 0
        %p181 = scmp.lt.s32.totalorder %s25, 0
        %s182 = scalar_select %p181, %s25, 0
        %s183 = sadd.s32 %s182, %s180
        %s184 = sadd.s32 %s183, %s178
        %s185 = smul.addr %s184, 8
        %s186 = scalar_lea.vmem %s0, %s185
        %p187 = pneg %p67
        %p188 = pneg %p64
        %s189 = smul.u32 4, %s25
        %p190 = scmp.lt.s32.totalorder %s23, 3
        %s191 = scalar_select %p190, %s23, 3
        %p192 = scmp.lt.s32.totalorder %s189, 3
        %s193 = scalar_select %p192, %s189, 3
        %s194 = smul.addr %s191, 4
        %s195 = sadd.s32 %s193, %s194
        %s196 = smul.addr %s195, 8
        %s197 = scalar_lea.vmem %s1, %s196
        %p198 = pneg %p95
        %p199 = pneg %p92
        %p200 = pneg %p125
        %p201 = pneg %p122
        %s202 = sand.u32 %s112, 1
        %s203 = scalar_lea.sflag [#allocation4], %s202
        %s204 = sand.u32 %s112, 1
        %s205 = smul.addr %s204, 8
        %s206 = scalar_lea.vmem [#allocation3], %s205
        %p207 = scmp.lt.s32.totalorder %s22, 1
        %s208 = scalar_select %p207, %s22, 1
        %p209 = scmp.lt.s32.totalorder %s24, 0
        %s210 = scalar_select %p209, %s24, 0
        %p211 = scmp.lt.s32.totalorder %s25, 0
        %s212 = scalar_select %p211, %s25, 0
        %s213 = sadd.s32 %s212, %s210
        %s214 = sadd.s32 %s213, %s208
        %s215 = smul.addr %s214, 8
        %s216 = scalar_lea.vmem %s0, %s215
        %s217 = smul.u32 4, %s25
        %p218 = scmp.lt.s32.totalorder %s23, 3
        %s219 = scalar_select %p218, %s23, 3
        %p220 = scmp.lt.s32.totalorder %s217, 3
        %s221 = scalar_select %p220, %s217, 3
        %s222 = smul.addr %s219, 4
        %s223 = sadd.s32 %s221, %s222
        %s224 = smul.addr %s223, 8
        %s225 = scalar_lea.vmem %s1, %s224
        %s226 = smul.u32 4, %s25
        %p227 = scmp.eq.s32.totalorder %s25, 0
        // Predicated region
        $region29: #{tpu_custom_call.1} parent=27 // pred_check
          %p228 = pneg %p227
        $region30: #{tpu_custom_call.1} parent=27 // pred_check_branch
          %230 = sbr.rel (%p228) target = $region32
        $region31: #{tpu_custom_call.1} parent=27 // pred_region
          %vm231 = vcmask 64512
          %232 = vst.msk [vmem:[#allocation2] sm:$0xff] %vm231, 0.0
        $region32: #{tpu_custom_call.1} parent=27 // pred_fallthru
          _
        %v233 = vld [vmem:[#allocation2] sm:$0xff]
        %v234 = vld [vmem:[%s216] sm:$0xff]
        %v235 = vld [vmem:[%s225] sm:$0xff]
        %v236 = vld [vmem:[%s225 + $0x8] sm:$0xff]
        %v237 = vld [vmem:[%s225 + $0x10] sm:$0xff]
        %v238 = vld [vmem:[%s225 + $0x18] sm:$0xff]
        %vm239 = vcmask 261120
        %v241 = vsel %vm239, %v234, 0
        %243 = vmatprep.subr.mxu0 0.0
        %244 = vmatpush1.msra.mxu0 0.0
        %245 = vmatprep.subr.mxu0 0.0
        %246 = vmatpush1.msra.mxu0 0.0
        %247 = vmatprep.subr.mxu0 0.0
        %248 = vmatpush1.msra.mxu0 0.0
        %249 = vmatprep.subr.mxu0 0.0
        %250 = vmatpush1.msra.mxu0 0.0
        %251 = vmatprep.subr.mxu0 0.0
        %252 = vmatpush1.msra.mxu0 0.0
        %253 = vmatprep.subr.mxu0 0.0
        %254 = vmatpush1.msra.mxu0 0.0
        %255 = vmatprep.subr.mxu0 0.0
        %256 = vmatpush1.msra.mxu0 0.0
        %257 = vmatprep.subr.mxu0 0.0
        %258 = vmatpush1.msra.mxu0 0.0
        %259 = vmatprep.subr.mxu0 0.0
        %260 = vmatpush1.msra.mxu0 0.0
        %261 = vmatprep.subr.mxu0 0.0
        %262 = vmatpush1.msra.mxu0 0.0
        %263 = vmatprep.subr.mxu0 0.0
        %264 = vmatpush1.msra.mxu0 0.0
        %265 = vmatprep.subr.mxu0 0.0
        %266 = vmatpush1.msra.mxu0 0.0
        %267 = vmatprep.subr.mxu0 0.0
        %268 = vmatpush1.msra.mxu0 %v238
        %269 = vmatprep.subr.mxu0 0.0
        %270 = vmatpush1.msra.mxu0 %v237
        %271 = vmatprep.subr.mxu0 0.0
        %272 = vmatpush1.msra.mxu0 %v236
        %273 = vmatprep.subr.mxu0 0.0
        %274 = vmatpush1.msra.mxu0 %v235
        %275 = vmatprep.subr.mxu0 0.0
        %276 = vmatpush2.msra.mxu0 0.0
        %277 = vmatprep.subr.mxu0 0.0
        %278 = vmatpush2.msra.mxu0 0.0
        %279 = vmatprep.subr.mxu0 0.0
        %280 = vmatpush2.msra.mxu0 0.0
        %281 = vmatprep.subr.mxu0 0.0
        %282 = vmatpush2.msra.mxu0 0.0
        %283 = vmatprep.subr.mxu0 0.0
        %284 = vmatpush2.msra.mxu0 0.0
        %285 = vmatprep.subr.mxu0 0.0
        %286 = vmatpush2.msra.mxu0 0.0
        %287 = vmatprep.subr.mxu0 0.0
        %288 = vmatpush2.msra.mxu0 0.0
        %289 = vmatprep.subr.mxu0 0.0
        %290 = vmatpush2.msra.mxu0 0.0
        %291 = vmatprep.subr.mxu0 0.0
        %292 = vmatpush2.msra.mxu0 0.0
        %293 = vmatprep.subr.mxu0 0.0
        %294 = vmatpush2.msra.mxu0 0.0
        %295 = vmatprep.subr.mxu0 0.0
        %296 = vmatpush2.msra.mxu0 0.0
        %297 = vmatprep.subr.mxu0 0.0
        %298 = vmatpush2.msra.mxu0 0.0
        %299 = vmatprep.subr.mxu0 0.0
        %300 = vmatpush2.msra.mxu0 0.0
        %301 = vmatprep.subr.mxu0 0.0
        %302 = vmatpush2.msra.mxu0 0.0
        %303 = vmatprep.subr.mxu0 0.0
        %304 = vmatpush2.msra.mxu0 0.0
        %305 = vmatprep.subr.mxu0 0.0
        %306 = vmatpush2.msra.mxu0 0.0
        %307 = vmatprep.mubr.f32.mxu0 0.0
        %308 = vmatmul.mubr.f32.gmra.mxu0 %v241
        %v309 = vpop.f32.mrf.mxu0
        %v310 = vadd.f32 0.0, %v309
        %v311 = vpop.f32.mrf.mxu0
        %312 = vdwg.mxu0
        %v313 = vadd.f32 %v233, %v310
        %vm314 = vcmask 64512
        %315 = vst.msk [vmem:[#allocation2] sm:$0xff] %vm314, %v313
        // Predicated region
        $region33: #{tpu_custom_call.1} parent=27 // pred_check
          %p316 = pneg %p227
        $region34: #{tpu_custom_call.1} parent=27 // pred_check_branch
          %318 = sbr.rel (%p316) target = $region36
        $region35: #{tpu_custom_call.1} parent=27 // pred_region
          %v319 = vld [vmem:[#allocation2] sm:$0xff]
          %320 = vst.msk [vmem:[%s206] sm:$0xff] %vm314, %v319
        $region36: #{tpu_custom_call.1} parent=27 // pred_fallthru
          _
        %s321 = sand.u32 %s112, 1
        %s322 = scalar_lea.sflag [#allocation4], %s321
        %s323 = sand.u32 %s112, 1
        %s324 = smul.addr %s323, 8
        %s325 = scalar_lea.vmem [#allocation3], %s324
        // Predicated region
        $region37: #{tpu_custom_call.1} parent=27 // pred_check
          %p326 = pneg %p122
        $region38: #{tpu_custom_call.1} parent=27 // pred_check_branch
          %328 = sbr.rel (%p326) target = $region40
        $region39: #{tpu_custom_call.1} parent=27 // pred_region
          %s330 = ssub.s32 128, 128
          %331 = vsyncadd %s322, %s330
          %s332 = sadd.s32 %s24, %s23
          %s333 = smul.addr %s22, 4
          %s334 = sadd.s32 %s332, %s333
          %s335 = smul.addr %s334, 128
          %s336 = scalar_lea.hbm %s2, %s335
          %s338 = sshll.u32 %s325, 4
          %s339 = int_to_ptr.vmem [resolvable:$true] %s338
          %341 = dma.vmem_to_hbm [thread:$0]  %s339, 128, %s336, %s322
        $region40: #{tpu_custom_call.1} parent=27 // pred_fallthru
          _
      $region28: #{tpu_custom_call.1} parent=5 // pred_fallthru
        _
      %p342 = scmp.le.s32.totalorder 2, %s11
      // Predicated region
      $region41: #{tpu_custom_call.1} parent=5 // pred_check
        %p343 = pneg %p342
      $region42: #{tpu_custom_call.1} parent=5 // pred_check_branch
        %345 = sbr.rel (%p343) target = $region44
      $region43: #{tpu_custom_call.1} parent=5 // pred_region
        %s346 = ssub.s32 %s11, 2
        // Predicated region
        $region45: #{tpu_custom_call.1} parent=43 // pred_check
          %p347 = pneg %p128
        $region46: #{tpu_custom_call.1} parent=43 // pred_check_branch
          %349 = sbr.rel (%p347) target = $region48
        $region47: #{tpu_custom_call.1} parent=43 // pred_region
          %s350 = sand.u32 %s113, 1
          %s351 = scalar_lea.sflag [#allocation4], %s350
          %s352 = sand.u32 %s113, 1
          %s353 = smul.addr %s352, 8
          %s354 = scalar_lea.vmem [#allocation3], %s353
          %355 = dma.done %s351, 128
        $region48: #{tpu_custom_call.1} parent=43 // pred_fallthru
          _
      $region44: #{tpu_custom_call.1} parent=5 // pred_fallthru
        _
    $region6: #{tpu_custom_call.1} parent=1 // loop_footer
      %s15 = sadd.s32 1, %s11
    $region7: #{tpu_custom_call.1} parent=1 // loop_footer_branch
      %10 = sbr.rel target = $region3
    $region8: #{tpu_custom_call.1} parent=1 // loop_exit
      _
    %356 = vsyncpa [#allocation4], 1
    %s357 = scalar_lea.sflag [#allocation4], 1
    %358 = vsyncpa %s357, 1

</llo_original>
